<compile_context>
chip_gen: v7x
topology: tpu7x:2x2x1
jax: 0.10.0
libtpu: 0.0.40
codegen_flags: <defaults>
</compile_context>

<pallas_src>
import functools

import jax
import jax.numpy as jnp
from jax import lax
from jax.experimental import pallas as pl
from jax.experimental.pallas import tpu as pltpu


# -----------------------------------------------------------------------------
# Single fused kernel:
#   pooled = x_flat @ W_eff + b_eff        (folded conv stack + spatial mean)
#   MLP -> log_softmax -> NLLLoss(mean) -> * sample_weight
# -----------------------------------------------------------------------------
def _fused_kernel(x_ref, weff_ref, wmlp_ref, b_ref, o_ref,
                  *, C, target_label, sample_weight):
    x = x_ref[...]                                           # (N, C*H*W)

    # Folded extractor + global average pool: one MXU-shaped matmul.
    pooled = (jnp.dot(x, weff_ref[...], preferred_element_type=jnp.float32)
              + b_ref[:, 0:C])                               # (N, C)

    # Classifier MLP (Dropout is identity in eval mode).
    w1 = wmlp_ref[:, 0:C]
    w2 = wmlp_ref[:, C:2 * C]
    w3 = wmlp_ref[:, 2 * C:2 * C + 2]
    h1 = jnp.maximum(
        jnp.dot(pooled, w1, preferred_element_type=jnp.float32)
        + b_ref[:, C:2 * C], 0.0)
    h2 = jnp.maximum(
        jnp.dot(h1, w2, preferred_element_type=jnp.float32)
        + b_ref[:, 2 * C:3 * C], 0.0)
    logits = (jnp.dot(h2, w3, preferred_element_type=jnp.float32)
              + b_ref[:, 3 * C:3 * C + 2])                   # (N, 2)

    # log_softmax over the width-2 class dim via explicit element picks.
    l0 = logits[:, 0:1]
    l1 = logits[:, 1:2]
    m = jnp.maximum(l0, l1)
    lse = m + jnp.log(jnp.exp(l0 - m) + jnp.exp(l1 - m))     # (N, 1)

    # NLLLoss with a compile-time-constant target, reduction='mean'.
    picked = logits[:, target_label:target_label + 1]        # static slice
    loss = -jnp.mean(picked - lse, axis=0, keepdims=True)    # (1, 1)
    o_ref[...] = loss * sample_weight


def vgg16_two_discriminator_loss(x_nchw, packed, target_label, domain,
                                 sample_weights):
    """x_nchw: (N, C, H, W) float32 features (PyTorch-native layout)."""
    N, C, H, W = x_nchw.shape
    D = C * H * W

    # Gradient reversal layer: identity in the forward pass.
    sw = float(sample_weights) if domain == "source" else 1.0
    x_flat = x_nchw.astype(jnp.float32).reshape(N, D)        # metadata-only

    kernel = functools.partial(_fused_kernel, C=C,
                               target_label=int(target_label),
                               sample_weight=sw)
    vmem = pl.BlockSpec(memory_space=pltpu.MemorySpace.VMEM)

    flops = 2 * N * D * C + 2 * N * C * (2 * C + 2)
    bytes_accessed = 4 * (N * D + D * C + C * (2 * C + 2) + (3 * C + 2) + 1)
    ce = pl.CostEstimate(flops=flops, transcendentals=3 * N,
                         bytes_accessed=bytes_accessed)

    loss = pl.pallas_call(
        kernel,
        out_shape=jax.ShapeDtypeStruct((1, 1), jnp.float32),
        in_specs=[vmem] * 4,
        out_specs=vmem,
        cost_estimate=ce,
    )(x_flat,
      packed["w_eff"].astype(jnp.float32),
      packed["w_mlp"].astype(jnp.float32),
      packed["b_all"].astype(jnp.float32))
    return loss[0, 0]


# -----------------------------------------------------------------------------
# Parameter construction / folding (init-time, plain JAX).
# -----------------------------------------------------------------------------
def init_raw_params(key, C):
    ks = jax.random.split(key, 9)
    conv_ws = [jax.random.normal(ks[i], (C, C, 3, 3), jnp.float32) * 0.1
               for i in range(3)]                                   # OIHW
    conv_bs = [jax.random.normal(ks[3 + i], (C,), jnp.float32) * 0.05
               for i in range(3)]
    return {
        "conv_ws": conv_ws, "conv_bs": conv_bs,
        # Linear weights stored as (in, out)  (== PyTorch (out, in).T).
        "w1": jax.random.normal(ks[6], (C, C), jnp.float32) * 0.1,
        "b1": jax.random.normal(ks[6], (C,), jnp.float32) * 0.05,
        "w2": jax.random.normal(ks[7], (C, C), jnp.float32) * 0.1,
        "b2": jax.random.normal(ks[7], (C,), jnp.float32) * 0.05,
        # dis_score: normal(std=0.01) weight, zero bias (matches nn.init).
        "w3": jax.random.normal(ks[8], (C, 2), jnp.float32) * 0.01,
        "b3": jnp.zeros((2,), jnp.float32),
    }


def _fold_extractor(conv_ws, conv_bs, C, H, W):
    """Fold conv0∘conv1∘conv2∘spatial_mean (affine in x) into (W_eff, b_eff)
    for the NCHW-flattened input of length C*H*W."""
    def feat(x_flat):
        z = x_flat.reshape(1, C, H, W)
        for w, b in zip(conv_ws, conv_bs):
            z = lax.conv_general_dilated(
                z, w, window_strides=(1, 1), padding="VALID",
                dimension_numbers=("NCHW", "OIHW", "NCHW"),
                precision=lax.Precision.HIGHEST)
            z = z + b.reshape(1, C, 1, 1)
        return jnp.mean(z, axis=(2, 3))[0]                   # (C,)

    d = C * H * W
    zeros = jnp.zeros((d,), jnp.float32)
    b_eff = feat(zeros)                                       # (C,)
    w_eff_t = jax.jacrev(feat)(zeros)                         # (C, d) linear part
    return jnp.transpose(w_eff_t), b_eff                      # (d, C), (C,)


def pack_params(raw, C, H, W):
    w_eff, b_eff = _fold_extractor(raw["conv_ws"], raw["conv_bs"], C, H, W)
    w_mlp = jnp.concatenate([raw["w1"], raw["w2"], raw["w3"]], axis=1)  # (C, 2C+2)
    b_all = jnp.concatenate(
        [b_eff, raw["b1"], raw["b2"], raw["b3"]]).reshape(1, 3 * C + 2)
    return {"w_eff": w_eff, "w_mlp": w_mlp, "b_all": b_all}


# -----------------------------------------------------------------------------
# Pure-JAX reference (unfolded), used for a sanity check only.
# -----------------------------------------------------------------------------
def reference_loss(x_nchw, raw, target_label, domain, sample_weights):
    z = x_nchw.astype(jnp.float32)
    for w, b in zip(raw["conv_ws"], raw["conv_bs"]):
        z = lax.conv_general_dilated(
            z, w, window_strides=(1, 1), padding="VALID",
            dimension_numbers=("NCHW", "OIHW", "NCHW"),
            precision=lax.Precision.HIGHEST)
        z = z + b.reshape(1, -1, 1, 1)
    feat = jnp.mean(z, axis=(2, 3))                           # (N, C)
    h = jnp.maximum(feat @ raw["w1"] + raw["b1"], 0.0)
    h = jnp.maximum(h @ raw["w2"] + raw["b2"], 0.0)
    logits = h @ raw["w3"] + raw["b3"]
    logp = jax.nn.log_softmax(logits, axis=1)
    loss = -jnp.mean(logp[:, target_label])
    if domain == "source":
        loss = loss * sample_weights
    return loss


if __name__ == "__main__":
    key = jax.random.PRNGKey(0)
    k_x, k_p = jax.random.split(key)

    N, C, H, W = 2, 8, 16, 16          # small shapes consistent with the module
    x = jax.random.normal(k_x, (N, C, H, W), jnp.float32)     # PyTorch NCHW

    raw = init_raw_params(k_p, C)
    packed = pack_params(raw, C, H, W)

    sample_weights = 0.5               # cfg.MODEL.ROI_TWO_DIS.DOM.SAMPLE_WEIGHTS
    target_label = 0                   # source-domain target

    loss = vgg16_two_discriminator_loss(
        x, packed, target_label, domain="source",
        sample_weights=sample_weights)
    jax.block_until_ready(loss)

    ref = reference_loss(x, raw, target_label, "source", sample_weights)
    jax.block_until_ready(ref)

    assert loss.shape == () and bool(jnp.isfinite(loss))
    assert float(jnp.abs(loss - ref)) < 5e-2, (float(loss), float(ref))
    print("KERNEL_OK")
</pallas_src>

<mosaic_0001>
module attributes {stable_mosaic.version = 11 : i64} {
  func.func @_fused_kernel(%arg0: memref<2x2048xf32, #tpu.memory_space<vmem>>, %arg1: memref<2048x8xf32, #tpu.memory_space<vmem>>, %arg2: memref<8x18xf32, #tpu.memory_space<vmem>>, %arg3: memref<1x26xf32, #tpu.memory_space<vmem>>, %arg4: memref<1x1xf32, #tpu.memory_space<vmem>>) attributes {dimension_semantics = [], scalar_prefetch = 0 : i64, scratch_operands = 0 : i64, tpu.core_type = #tpu.core_type<tc>} {
    %c0 = arith.constant 0 : index
    %c0_0 = arith.constant 0 : index
    %0 = vector.load %arg0[%c0, %c0_0] : memref<2x2048xf32, #tpu.memory_space<vmem>>, vector<2x2048xf32>
    %c0_1 = arith.constant 0 : index
    %c0_2 = arith.constant 0 : index
    %1 = vector.load %arg1[%c0_1, %c0_2] : memref<2048x8xf32, #tpu.memory_space<vmem>>, vector<2048x8xf32>
    %cst = arith.constant dense<0.000000e+00> : vector<2x8xf32>
    %2 = tpu.matmul %0, %1, %cst {dimension_numbers = #tpu.dot_dimension_numbers<[1], [0], [0], [1], [0, 0, 1, 1], [], []>} : vector<2x2048xf32>, vector<2048x8xf32>, vector<2x8xf32> -> vector<2x8xf32>
    %c0_3 = arith.constant 0 : index
    %c0_4 = arith.constant 0 : index
    %3 = vector.load %arg3[%c0_3, %c0_4] : memref<1x26xf32, #tpu.memory_space<vmem>>, vector<1x8xf32>
    %4 = vector.broadcast %3 : vector<1x8xf32> to vector<2x8xf32>
    %5 = arith.addf %2, %4 : vector<2x8xf32>
    %c0_5 = arith.constant 0 : index
    %c0_6 = arith.constant 0 : index
    %6 = vector.load %arg2[%c0_5, %c0_6] : memref<8x18xf32, #tpu.memory_space<vmem>>, vector<8x8xf32>
    %c0_7 = arith.constant 0 : index
    %c8 = arith.constant 8 : index
    %7 = vector.load %arg2[%c0_7, %c8] : memref<8x18xf32, #tpu.memory_space<vmem>>, vector<8x8xf32>
    %c0_8 = arith.constant 0 : index
    %c16 = arith.constant 16 : index
    %8 = vector.load %arg2[%c0_8, %c16] : memref<8x18xf32, #tpu.memory_space<vmem>>, vector<8x2xf32>
    %cst_9 = arith.constant dense<0.000000e+00> : vector<2x8xf32>
    %9 = tpu.matmul %5, %6, %cst_9 {dimension_numbers = #tpu.dot_dimension_numbers<[1], [0], [0], [1], [0, 0, 1, 1], [], []>} : vector<2x8xf32>, vector<8x8xf32>, vector<2x8xf32> -> vector<2x8xf32>
    %c0_10 = arith.constant 0 : index
    %c8_11 = arith.constant 8 : index
    %10 = vector.load %arg3[%c0_10, %c8_11] : memref<1x26xf32, #tpu.memory_space<vmem>>, vector<1x8xf32>
    %11 = vector.broadcast %10 : vector<1x8xf32> to vector<2x8xf32>
    %12 = arith.addf %9, %11 : vector<2x8xf32>
    %cst_12 = arith.constant 0.000000e+00 : f32
    %13 = vector.broadcast %cst_12 : f32 to vector<2x8xf32>
    %14 = arith.maximumf %12, %13 : vector<2x8xf32>
    %cst_13 = arith.constant dense<0.000000e+00> : vector<2x8xf32>
    %15 = tpu.matmul %14, %7, %cst_13 {dimension_numbers = #tpu.dot_dimension_numbers<[1], [0], [0], [1], [0, 0, 1, 1], [], []>} : vector<2x8xf32>, vector<8x8xf32>, vector<2x8xf32> -> vector<2x8xf32>
    %c0_14 = arith.constant 0 : index
    %c16_15 = arith.constant 16 : index
    %16 = vector.load %arg3[%c0_14, %c16_15] : memref<1x26xf32, #tpu.memory_space<vmem>>, vector<1x8xf32>
    %17 = vector.broadcast %16 : vector<1x8xf32> to vector<2x8xf32>
    %18 = arith.addf %15, %17 : vector<2x8xf32>
    %cst_16 = arith.constant 0.000000e+00 : f32
    %19 = vector.broadcast %cst_16 : f32 to vector<2x8xf32>
    %20 = arith.maximumf %18, %19 : vector<2x8xf32>
    %cst_17 = arith.constant dense<0.000000e+00> : vector<2x2xf32>
    %21 = tpu.matmul %20, %8, %cst_17 {dimension_numbers = #tpu.dot_dimension_numbers<[1], [0], [0], [1], [0, 0, 1, 1], [], []>} : vector<2x8xf32>, vector<8x2xf32>, vector<2x2xf32> -> vector<2x2xf32>
    %c0_18 = arith.constant 0 : index
    %c24 = arith.constant 24 : index
    %22 = vector.load %arg3[%c0_18, %c24] : memref<1x26xf32, #tpu.memory_space<vmem>>, vector<1x2xf32>
    %23 = vector.broadcast %22 : vector<1x2xf32> to vector<2x2xf32>
    %24 = arith.addf %21, %23 : vector<2x2xf32>
    %25 = vector.extract_strided_slice %24 {offsets = [0, 0], sizes = [2, 1], strides = [1, 1]} : vector<2x2xf32> to vector<2x1xf32>
    %26 = vector.extract_strided_slice %24 {offsets = [0, 1], sizes = [2, 1], strides = [1, 1]} : vector<2x2xf32> to vector<2x1xf32>
    %27 = arith.maximumf %25, %26 : vector<2x1xf32>
    %28 = arith.subf %25, %27 : vector<2x1xf32>
    %29 = math.exp %28 : vector<2x1xf32>
    %30 = arith.subf %26, %27 : vector<2x1xf32>
    %31 = math.exp %30 : vector<2x1xf32>
    %32 = arith.addf %29, %31 : vector<2x1xf32>
    %33 = math.log %32 : vector<2x1xf32>
    %34 = arith.addf %27, %33 : vector<2x1xf32>
    %35 = vector.extract_strided_slice %24 {offsets = [0, 0], sizes = [2, 1], strides = [1, 1]} : vector<2x2xf32> to vector<2x1xf32>
    %36 = arith.subf %35, %34 : vector<2x1xf32>
    %cst_19 = arith.constant dense<0.000000e+00> : vector<1xf32>
    %37 = vector.multi_reduction <add>, %36, %cst_19 [0] : vector<2x1xf32> to vector<1xf32>
    %38 = vector.shape_cast %37 : vector<1xf32> to vector<1x1xf32>
    %cst_20 = arith.constant 2.000000e+00 : f32
    %39 = vector.broadcast %cst_20 : f32 to vector<1x1xf32>
    %40 = arith.divf %38, %39 : vector<1x1xf32>
    %cst_21 = arith.constant 0.000000e+00 : f32
    %41 = vector.broadcast %cst_21 : f32 to vector<1x1xf32>
    %42 = arith.subf %41, %40 : vector<1x1xf32>
    %cst_22 = arith.constant 5.000000e-01 : f32
    %43 = vector.broadcast %cst_22 : f32 to vector<1x1xf32>
    %44 = arith.mulf %42, %43 : vector<1x1xf32>
    %c0_23 = arith.constant 0 : index
    %c0_24 = arith.constant 0 : index
    %45 = vector.load %arg4[%c0_23, %c0_24] : memref<1x1xf32, #tpu.memory_space<vmem>>, vector<1x1xf32>
    tpu.vector_store %arg4[%c0_23, %c0_24], %44 {strides = array<i32>} : memref<1x1xf32, #tpu.memory_space<vmem>>, vector<1x1xf32>,
    return
  }
}

</mosaic_0001>

<llo_original>
// kernel: tpu_custom_call.1
$region0: #{tpu_custom_call.1}
  #allocation0 [shape = 'u32[]', space=smem, size = 0x4, offset = 0x4, fixed_abs, tag = 'smem constant byte address 0x4 - core index']
  #allocation1 [shape = 'u32[144,128]{1,0:T(1,128)}', space=vmem, size = 0x12000, scoped, tag = 'internal scratch']
  %s0 = inlined_call_operand.vmem [shape: f32[2,2048], index: 0, kind: input, shape index: {}]
  %s1 = inlined_call_operand.vmem [shape: f32[2048,8], index: 1, kind: input, shape index: {}]
  %s2 = inlined_call_operand.vmem [shape: f32[8,18], index: 2, kind: input, shape index: {}]
  %s3 = inlined_call_operand.vmem [shape: f32[1,26], index: 3, kind: input, shape index: {}]
  %s4 = inlined_call_operand.hbm [shape: f32[1,1], index: 4, kind: output, shape index: {}]
  %s5 = sld [smem:[#allocation0]]
  $region26: #{tpu_custom_call.1} parent=0
    _
  %s7 = ssub.s32 1, %s5
  %s8 = scalar_select 0, %s7, %s5
  $region1: #{tpu_custom_call.1} parent=0
    #allocation2 [shape = 'u8[512]{0}', space=vmem, size = 0x400, scoped, tag = 'output window, operand 0, single buffered']
    #allocation3 [shape = 's32[1]{0}', space=sflag, size = 0x4, scoped, tag = 'scoped memory for tpu_custom_call.1']
    %9 = vsyncpa [#allocation3], 0
    // Predicated region
    $region2: #{tpu_custom_call.1} parent=1 // pred_check
      _
    $region3: #{tpu_custom_call.1} parent=1 // pred_check_branch
      %11 = sbr.rel (0) target = $region5
    $region4: #{tpu_custom_call.1} parent=1 // pred_region
      _
    $region5: #{tpu_custom_call.1} parent=1 // pred_fallthru
      _
    // Predicated region
    $region6: #{tpu_custom_call.1} parent=1 // pred_check
      _
    $region7: #{tpu_custom_call.1} parent=1 // pred_check_branch
      %13 = sbr.rel (0) target = $region9
    $region8: #{tpu_custom_call.1} parent=1 // pred_region
      _
    $region9: #{tpu_custom_call.1} parent=1 // pred_fallthru
      _
    // Predicated region
    $region10: #{tpu_custom_call.1} parent=1 // pred_check
      _
    $region11: #{tpu_custom_call.1} parent=1 // pred_check_branch
      %15 = sbr.rel (0) target = $region13
    $region12: #{tpu_custom_call.1} parent=1 // pred_region
      _
    $region13: #{tpu_custom_call.1} parent=1 // pred_fallthru
      _
    // Predicated region
    $region14: #{tpu_custom_call.1} parent=1 // pred_check
      _
    $region15: #{tpu_custom_call.1} parent=1 // pred_check_branch
      %17 = sbr.rel (0) target = $region17
    $region16: #{tpu_custom_call.1} parent=1 // pred_region
      _
    $region17: #{tpu_custom_call.1} parent=1 // pred_fallthru
      _
    %v18 = vld [vmem:[%s0] sm:$0xff]
    %v19 = vld [vmem:[%s0 + $0x8] sm:$0xff]
    %v20 = vld [vmem:[%s0 + $0x10] sm:$0xff]
    %v21 = vld [vmem:[%s0 + $0x18] sm:$0xff]
    %v22 = vld [vmem:[%s1] sm:$0xff]
    %v23 = vld [vmem:[%s1 + $0x8] sm:$0xff]
    %v24 = vld [vmem:[%s1 + $0x10] sm:$0xff]
    %v25 = vld [vmem:[%s1 + $0x18] sm:$0xff]
    %v26 = vld [vmem:[%s1 + $0x20] sm:$0xff]
    %v27 = vld [vmem:[%s1 + $0x28] sm:$0xff]
    %v28 = vld [vmem:[%s1 + $0x30] sm:$0xff]
    %v29 = vld [vmem:[%s1 + $0x38] sm:$0xff]
    %v30 = vld [vmem:[%s1 + $0x40] sm:$0xff]
    %v31 = vld [vmem:[%s1 + $0x48] sm:$0xff]
    %v32 = vld [vmem:[%s1 + $0x50] sm:$0xff]
    %v33 = vld [vmem:[%s1 + $0x58] sm:$0xff]
    %v34 = vld [vmem:[%s1 + $0x60] sm:$0xff]
    %v35 = vld [vmem:[%s1 + $0x68] sm:$0xff]
    %v36 = vld [vmem:[%s1 + $0x70] sm:$0xff]
    %v37 = vld [vmem:[%s1 + $0x78] sm:$0xff]
    %v38 = vld [vmem:[%s1 + $0x80] sm:$0xff]
    %v39 = vld [vmem:[%s1 + $0x88] sm:$0xff]
    %v40 = vld [vmem:[%s1 + $0x90] sm:$0xff]
    %v41 = vld [vmem:[%s1 + $0x98] sm:$0xff]
    %v42 = vld [vmem:[%s1 + $0xa0] sm:$0xff]
    %v43 = vld [vmem:[%s1 + $0xa8] sm:$0xff]
    %v44 = vld [vmem:[%s1 + $0xb0] sm:$0xff]
    %v45 = vld [vmem:[%s1 + $0xb8] sm:$0xff]
    %v46 = vld [vmem:[%s1 + $0xc0] sm:$0xff]
    %v47 = vld [vmem:[%s1 + $0xc8] sm:$0xff]
    %v48 = vld [vmem:[%s1 + $0xd0] sm:$0xff]
    %v49 = vld [vmem:[%s1 + $0xd8] sm:$0xff]
    %v50 = vld [vmem:[%s1 + $0xe0] sm:$0xff]
    %v51 = vld [vmem:[%s1 + $0xe8] sm:$0xff]
    %v52 = vld [vmem:[%s1 + $0xf0] sm:$0xff]
    %v53 = vld [vmem:[%s1 + $0xf8] sm:$0xff]
    %v54 = vld [vmem:[%s1 + $0x100] sm:$0xff]
    %v55 = vld [vmem:[%s1 + $0x108] sm:$0xff]
    %v56 = vld [vmem:[%s1 + $0x110] sm:$0xff]
    %v57 = vld [vmem:[%s1 + $0x118] sm:$0xff]
    %v58 = vld [vmem:[%s1 + $0x120] sm:$0xff]
    %v59 = vld [vmem:[%s1 + $0x128] sm:$0xff]
    %v60 = vld [vmem:[%s1 + $0x130] sm:$0xff]
    %v61 = vld [vmem:[%s1 + $0x138] sm:$0xff]
    %v62 = vld [vmem:[%s1 + $0x140] sm:$0xff]
    %v63 = vld [vmem:[%s1 + $0x148] sm:$0xff]
    %v64 = vld [vmem:[%s1 + $0x150] sm:$0xff]
    %v65 = vld [vmem:[%s1 + $0x158] sm:$0xff]
    %v66 = vld [vmem:[%s1 + $0x160] sm:$0xff]
    %v67 = vld [vmem:[%s1 + $0x168] sm:$0xff]
    %v68 = vld [vmem:[%s1 + $0x170] sm:$0xff]
    %v69 = vld [vmem:[%s1 + $0x178] sm:$0xff]
    %v70 = vld [vmem:[%s1 + $0x180] sm:$0xff]
    %v71 = vld [vmem:[%s1 + $0x188] sm:$0xff]
    %v72 = vld [vmem:[%s1 + $0x190] sm:$0xff]
    %v73 = vld [vmem:[%s1 + $0x198] sm:$0xff]
    %v74 = vld [vmem:[%s1 + $0x1a0] sm:$0xff]
    %v75 = vld [vmem:[%s1 + $0x1a8] sm:$0xff]
    %v76 = vld [vmem:[%s1 + $0x1b0] sm:$0xff]
    %v77 = vld [vmem:[%s1 + $0x1b8] sm:$0xff]
    %v78 = vld [vmem:[%s1 + $0x1c0] sm:$0xff]
    %v79 = vld [vmem:[%s1 + $0x1c8] sm:$0xff]
    %v80 = vld [vmem:[%s1 + $0x1d0] sm:$0xff]
    %v81 = vld [vmem:[%s1 + $0x1d8] sm:$0xff]
    %v82 = vld [vmem:[%s1 + $0x1e0] sm:$0xff]
    %v83 = vld [vmem:[%s1 + $0x1e8] sm:$0xff]
    %v84 = vld [vmem:[%s1 + $0x1f0] sm:$0xff]
    %v85 = vld [vmem:[%s1 + $0x1f8] sm:$0xff]
    %v86 = vld [vmem:[%s1 + $0x200] sm:$0xff]
    %v87 = vld [vmem:[%s1 + $0x208] sm:$0xff]
    %v88 = vld [vmem:[%s1 + $0x210] sm:$0xff]
    %v89 = vld [vmem:[%s1 + $0x218] sm:$0xff]
    %v90 = vld [vmem:[%s1 + $0x220] sm:$0xff]
    %v91 = vld [vmem:[%s1 + $0x228] sm:$0xff]
    %v92 = vld [vmem:[%s1 + $0x230] sm:$0xff]
    %v93 = vld [vmem:[%s1 + $0x238] sm:$0xff]
    %v94 = vld [vmem:[%s1 + $0x240] sm:$0xff]
    %v95 = vld [vmem:[%s1 + $0x248] sm:$0xff]
    %v96 = vld [vmem:[%s1 + $0x250] sm:$0xff]
    %v97 = vld [vmem:[%s1 + $0x258] sm:$0xff]
    %v98 = vld [vmem:[%s1 + $0x260] sm:$0xff]
    %v99 = vld [vmem:[%s1 + $0x268] sm:$0xff]
    %v100 = vld [vmem:[%s1 + $0x270] sm:$0xff]
    %v101 = vld [vmem:[%s1 + $0x278] sm:$0xff]
    %v102 = vld [vmem:[%s1 + $0x280] sm:$0xff]
    %v103 = vld [vmem:[%s1 + $0x288] sm:$0xff]
    %v104 = vld [vmem:[%s1 + $0x290] sm:$0xff]
    %v105 = vld [vmem:[%s1 + $0x298] sm:$0xff]
    %v106 = vld [vmem:[%s1 + $0x2a0] sm:$0xff]
    %v107 = vld [vmem:[%s1 + $0x2a8] sm:$0xff]
    %v108 = vld [vmem:[%s1 + $0x2b0] sm:$0xff]
    %v109 = vld [vmem:[%s1 + $0x2b8] sm:$0xff]
    %v110 = vld [vmem:[%s1 + $0x2c0] sm:$0xff]
    %v111 = vld [vmem:[%s1 + $0x2c8] sm:$0xff]
    %v112 = vld [vmem:[%s1 + $0x2d0] sm:$0xff]
    %v113 = vld [vmem:[%s1 + $0x2d8] sm:$0xff]
    %v114 = vld [vmem:[%s1 + $0x2e0] sm:$0xff]
    %v115 = vld [vmem:[%s1 + $0x2e8] sm:$0xff]
    %v116 = vld [vmem:[%s1 + $0x2f0] sm:$0xff]
    %v117 = vld [vmem:[%s1 + $0x2f8] sm:$0xff]
    %v118 = vld [vmem:[%s1 + $0x300] sm:$0xff]
    %v119 = vld [vmem:[%s1 + $0x308] sm:$0xff]
    %v120 = vld [vmem:[%s1 + $0x310] sm:$0xff]
    %v121 = vld [vmem:[%s1 + $0x318] sm:$0xff]
    %v122 = vld [vmem:[%s1 + $0x320] sm:$0xff]
    %v123 = vld [vmem:[%s1 + $0x328] sm:$0xff]
    %v124 = vld [vmem:[%s1 + $0x330] sm:$0xff]
    %v125 = vld [vmem:[%s1 + $0x338] sm:$0xff]
    %v126 = vld [vmem:[%s1 + $0x340] sm:$0xff]
    %v127 = vld [vmem:[%s1 + $0x348] sm:$0xff]
    %v128 = vld [vmem:[%s1 + $0x350] sm:$0xff]
    %v129 = vld [vmem:[%s1 + $0x358] sm:$0xff]
    %v130 = vld [vmem:[%s1 + $0x360] sm:$0xff]
    %v131 = vld [vmem:[%s1 + $0x368] sm:$0xff]
    %v132 = vld [vmem:[%s1 + $0x370] sm:$0xff]
    %v133 = vld [vmem:[%s1 + $0x378] sm:$0xff]
    %v134 = vld [vmem:[%s1 + $0x380] sm:$0xff]
    %v135 = vld [vmem:[%s1 + $0x388] sm:$0xff]
    %v136 = vld [vmem:[%s1 + $0x390] sm:$0xff]
    %v137 = vld [vmem:[%s1 + $0x398] sm:$0xff]
    %v138 = vld [vmem:[%s1 + $0x3a0] sm:$0xff]
    %v139 = vld [vmem:[%s1 + $0x3a8] sm:$0xff]
    %v140 = vld [vmem:[%s1 + $0x3b0] sm:$0xff]
    %v141 = vld [vmem:[%s1 + $0x3b8] sm:$0xff]
    %v142 = vld [vmem:[%s1 + $0x3c0] sm:$0xff]
    %v143 = vld [vmem:[%s1 + $0x3c8] sm:$0xff]
    %v144 = vld [vmem:[%s1 + $0x3d0] sm:$0xff]
    %v145 = vld [vmem:[%s1 + $0x3d8] sm:$0xff]
    %v146 = vld [vmem:[%s1 + $0x3e0] sm:$0xff]
    %v147 = vld [vmem:[%s1 + $0x3e8] sm:$0xff]
    %v148 = vld [vmem:[%s1 + $0x3f0] sm:$0xff]
    %v149 = vld [vmem:[%s1 + $0x3f8] sm:$0xff]
    %v150 = vld [vmem:[%s1 + $0x400] sm:$0xff]
    %v151 = vld [vmem:[%s1 + $0x408] sm:$0xff]
    %v152 = vld [vmem:[%s1 + $0x410] sm:$0xff]
    %v153 = vld [vmem:[%s1 + $0x418] sm:$0xff]
    %v154 = vld [vmem:[%s1 + $0x420] sm:$0xff]
    %v155 = vld [vmem:[%s1 + $0x428] sm:$0xff]
    %v156 = vld [vmem:[%s1 + $0x430] sm:$0xff]
    %v157 = vld [vmem:[%s1 + $0x438] sm:$0xff]
    %v158 = vld [vmem:[%s1 + $0x440] sm:$0xff]
    %v159 = vld [vmem:[%s1 + $0x448] sm:$0xff]
    %v160 = vld [vmem:[%s1 + $0x450] sm:$0xff]
    %v161 = vld [vmem:[%s1 + $0x458] sm:$0xff]
    %v162 = vld [vmem:[%s1 + $0x460] sm:$0xff]
    %v163 = vld [vmem:[%s1 + $0x468] sm:$0xff]
    %v164 = vld [vmem:[%s1 + $0x470] sm:$0xff]
    %v165 = vld [vmem:[%s1 + $0x478] sm:$0xff]
    %v166 = vld [vmem:[%s1 + $0x480] sm:$0xff]
    %v167 = vld [vmem:[%s1 + $0x488] sm:$0xff]
    %v168 = vld [vmem:[%s1 + $0x490] sm:$0xff]
    %v169 = vld [vmem:[%s1 + $0x498] sm:$0xff]
    %v170 = vld [vmem:[%s1 + $0x4a0] sm:$0xff]
    %v171 = vld [vmem:[%s1 + $0x4a8] sm:$0xff]
    %v172 = vld [vmem:[%s1 + $0x4b0] sm:$0xff]
    %v173 = vld [vmem:[%s1 + $0x4b8] sm:$0xff]
    %v174 = vld [vmem:[%s1 + $0x4c0] sm:$0xff]
    %v175 = vld [vmem:[%s1 + $0x4c8] sm:$0xff]
    %v176 = vld [vmem:[%s1 + $0x4d0] sm:$0xff]
    %v177 = vld [vmem:[%s1 + $0x4d8] sm:$0xff]
    %v178 = vld [vmem:[%s1 + $0x4e0] sm:$0xff]
    %v179 = vld [vmem:[%s1 + $0x4e8] sm:$0xff]
    %v180 = vld [vmem:[%s1 + $0x4f0] sm:$0xff]
    %v181 = vld [vmem:[%s1 + $0x4f8] sm:$0xff]
    %v182 = vld [vmem:[%s1 + $0x500] sm:$0xff]
    %v183 = vld [vmem:[%s1 + $0x508] sm:$0xff]
    %v184 = vld [vmem:[%s1 + $0x510] sm:$0xff]
    %v185 = vld [vmem:[%s1 + $0x518] sm:$0xff]
    %v186 = vld [vmem:[%s1 + $0x520] sm:$0xff]
    %v187 = vld [vmem:[%s1 + $0x528] sm:$0xff]
    %v188 = vld [vmem:[%s1 + $0x530] sm:$0xff]
    %v189 = vld [vmem:[%s1 + $0x538] sm:$0xff]
    %v190 = vld [vmem:[%s1 + $0x540] sm:$0xff]
    %v191 = vld [vmem:[%s1 + $0x548] sm:$0xff]
    %v192 = vld [vmem:[%s1 + $0x550] sm:$0xff]
    %v193 = vld [vmem:[%s1 + $0x558] sm:$0xff]
    %v194 = vld [vmem:[%s1 + $0x560] sm:$0xff]
    %v195 = vld [vmem:[%s1 + $0x568] sm:$0xff]
    %v196 = vld [vmem:[%s1 + $0x570] sm:$0xff]
    %v197 = vld [vmem:[%s1 + $0x578] sm:$0xff]
    %v198 = vld [vmem:[%s1 + $0x580] sm:$0xff]
    %v199 = vld [vmem:[%s1 + $0x588] sm:$0xff]
    %v200 = vld [vmem:[%s1 + $0x590] sm:$0xff]
    %v201 = vld [vmem:[%s1 + $0x598] sm:$0xff]
    %v202 = vld [vmem:[%s1 + $0x5a0] sm:$0xff]
    %v203 = vld [vmem:[%s1 + $0x5a8] sm:$0xff]
    %v204 = vld [vmem:[%s1 + $0x5b0] sm:$0xff]
    %v205 = vld [vmem:[%s1 + $0x5b8] sm:$0xff]
    %v206 = vld [vmem:[%s1 + $0x5c0] sm:$0xff]
    %v207 = vld [vmem:[%s1 + $0x5c8] sm:$0xff]
    %v208 = vld [vmem:[%s1 + $0x5d0] sm:$0xff]
    %v209 = vld [vmem:[%s1 + $0x5d8] sm:$0xff]
    %v210 = vld [vmem:[%s1 + $0x5e0] sm:$0xff]
    %v211 = vld [vmem:[%s1 + $0x5e8] sm:$0xff]
    %v212 = vld [vmem:[%s1 + $0x5f0] sm:$0xff]
    %v213 = vld [vmem:[%s1 + $0x5f8] sm:$0xff]
    %v214 = vld [vmem:[%s1 + $0x600] sm:$0xff]
    %v215 = vld [vmem:[%s1 + $0x608] sm:$0xff]
    %v216 = vld [vmem:[%s1 + $0x610] sm:$0xff]
    %v217 = vld [vmem:[%s1 + $0x618] sm:$0xff]
    %v218 = vld [vmem:[%s1 + $0x620] sm:$0xff]
    %v219 = vld [vmem:[%s1 + $0x628] sm:$0xff]
    %v220 = vld [vmem:[%s1 + $0x630] sm:$0xff]
    %v221 = vld [vmem:[%s1 + $0x638] sm:$0xff]
    %v222 = vld [vmem:[%s1 + $0x640] sm:$0xff]
    %v223 = vld [vmem:[%s1 + $0x648] sm:$0xff]
    %v224 = vld [vmem:[%s1 + $0x650] sm:$0xff]
    %v225 = vld [vmem:[%s1 + $0x658] sm:$0xff]
    %v226 = vld [vmem:[%s1 + $0x660] sm:$0xff]
    %v227 = vld [vmem:[%s1 + $0x668] sm:$0xff]
    %v228 = vld [vmem:[%s1 + $0x670] sm:$0xff]
    %v229 = vld [vmem:[%s1 + $0x678] sm:$0xff]
    %v230 = vld [vmem:[%s1 + $0x680] sm:$0xff]
    %v231 = vld [vmem:[%s1 + $0x688] sm:$0xff]
    %v232 = vld [vmem:[%s1 + $0x690] sm:$0xff]
    %v233 = vld [vmem:[%s1 + $0x698] sm:$0xff]
    %v234 = vld [vmem:[%s1 + $0x6a0] sm:$0xff]
    %v235 = vld [vmem:[%s1 + $0x6a8] sm:$0xff]
    %v236 = vld [vmem:[%s1 + $0x6b0] sm:$0xff]
    %v237 = vld [vmem:[%s1 + $0x6b8] sm:$0xff]
    %v238 = vld [vmem:[%s1 + $0x6c0] sm:$0xff]
    %v239 = vld [vmem:[%s1 + $0x6c8] sm:$0xff]
    %v240 = vld [vmem:[%s1 + $0x6d0] sm:$0xff]
    %v241 = vld [vmem:[%s1 + $0x6d8] sm:$0xff]
    %v242 = vld [vmem:[%s1 + $0x6e0] sm:$0xff]
    %v243 = vld [vmem:[%s1 + $0x6e8] sm:$0xff]
    %v244 = vld [vmem:[%s1 + $0x6f0] sm:$0xff]
    %v245 = vld [vmem:[%s1 + $0x6f8] sm:$0xff]
    %v246 = vld [vmem:[%s1 + $0x700] sm:$0xff]
    %v247 = vld [vmem:[%s1 + $0x708] sm:$0xff]
    %v248 = vld [vmem:[%s1 + $0x710] sm:$0xff]
    %v249 = vld [vmem:[%s1 + $0x718] sm:$0xff]
    %v250 = vld [vmem:[%s1 + $0x720] sm:$0xff]
    %v251 = vld [vmem:[%s1 + $0x728] sm:$0xff]
    %v252 = vld [vmem:[%s1 + $0x730] sm:$0xff]
    %v253 = vld [vmem:[%s1 + $0x738] sm:$0xff]
    %v254 = vld [vmem:[%s1 + $0x740] sm:$0xff]
    %v255 = vld [vmem:[%s1 + $0x748] sm:$0xff]
    %v256 = vld [vmem:[%s1 + $0x750] sm:$0xff]
    %v257 = vld [vmem:[%s1 + $0x758] sm:$0xff]
    %v258 = vld [vmem:[%s1 + $0x760] sm:$0xff]
    %v259 = vld [vmem:[%s1 + $0x768] sm:$0xff]
    %v260 = vld [vmem:[%s1 + $0x770] sm:$0xff]
    %v261 = vld [vmem:[%s1 + $0x778] sm:$0xff]
    %v262 = vld [vmem:[%s1 + $0x780] sm:$0xff]
    %v263 = vld [vmem:[%s1 + $0x788] sm:$0xff]
    %v264 = vld [vmem:[%s1 + $0x790] sm:$0xff]
    %v265 = vld [vmem:[%s1 + $0x798] sm:$0xff]
    %v266 = vld [vmem:[%s1 + $0x7a0] sm:$0xff]
    %v267 = vld [vmem:[%s1 + $0x7a8] sm:$0xff]
    %v268 = vld [vmem:[%s1 + $0x7b0] sm:$0xff]
    %v269 = vld [vmem:[%s1 + $0x7b8] sm:$0xff]
    %v270 = vld [vmem:[%s1 + $0x7c0] sm:$0xff]
    %v271 = vld [vmem:[%s1 + $0x7c8] sm:$0xff]
    %v272 = vld [vmem:[%s1 + $0x7d0] sm:$0xff]
    %v273 = vld [vmem:[%s1 + $0x7d8] sm:$0xff]
    %v274 = vld [vmem:[%s1 + $0x7e0] sm:$0xff]
    %v275 = vld [vmem:[%s1 + $0x7e8] sm:$0xff]
    %v276 = vld [vmem:[%s1 + $0x7f0] sm:$0xff]
    %v277 = vld [vmem:[%s1 + $0x7f8] sm:$0xff]
    %v278 = vld [vmem:[%s3] sm:$0x1]
    %v280 = vlaneseq
    %v281 = vshrl.u32 %v280, 7
    %v282 = vsub.s32 0, %v281
    %v283 = vrot.slane %v278, %v282
    %v289 = vcombine.high %v18, %v18
    %v291 = vunpack.c.l.s4 1983009808
    %v292 = vunpack.c.0.s8 %v291
    %v293 = vlaneseq
    %v294 = vshrl.u32 %v293, 7
    %v295 = vsub.s32 %v292, %v294
    %v296 = vrot.slane %v18, %v295
    %v298 = vunpack.c.l.s4 1983009808
    %v299 = vunpack.c.0.s8 %v298
    %v300 = vlaneseq
    %v301 = vshrl.u32 %v300, 7
    %v302 = vsub.s32 %v299, %v301
    %v303 = vrot.slane %v289, %v302
    %v304 = vcombine.high %v296, %v296
    %v305 = vcombine.high %v303, %v303
    %v306 = vcombine.high %v19, %v19
    %v308 = vunpack.c.l.s4 1983009808
    %v309 = vunpack.c.0.s8 %v308
    %v310 = vlaneseq
    %v311 = vshrl.u32 %v310, 7
    %v312 = vsub.s32 %v309, %v311
    %v313 = vrot.slane %v19, %v312
    %v315 = vunpack.c.l.s4 1983009808
    %v316 = vunpack.c.0.s8 %v315
    %v317 = vlaneseq
    %v318 = vshrl.u32 %v317, 7
    %v319 = vsub.s32 %v316, %v318
    %v320 = vrot.slane %v306, %v319
    %v321 = vcombine.high %v313, %v313
    %v322 = vcombine.high %v320, %v320
    %v323 = vcombine.high %v20, %v20
    %v325 = vunpack.c.l.s4 1983009808
    %v326 = vunpack.c.0.s8 %v325
    %v327 = vlaneseq
    %v328 = vshrl.u32 %v327, 7
    %v329 = vsub.s32 %v326, %v328
    %v330 = vrot.slane %v20, %v329
    %v332 = vunpack.c.l.s4 1983009808
    %v333 = vunpack.c.0.s8 %v332
    %v334 = vlaneseq
    %v335 = vshrl.u32 %v334, 7
    %v336 = vsub.s32 %v333, %v335
    %v337 = vrot.slane %v323, %v336
    %v338 = vcombine.high %v330, %v330
    %v339 = vcombine.high %v337, %v337
    %v340 = vcombine.high %v21, %v21
    %v342 = vunpack.c.l.s4 1983009808
    %v343 = vunpack.c.0.s8 %v342
    %v344 = vlaneseq
    %v345 = vshrl.u32 %v344, 7
    %v346 = vsub.s32 %v343, %v345
    %v347 = vrot.slane %v21, %v346
    %v349 = vunpack.c.l.s4 1983009808
    %v350 = vunpack.c.0.s8 %v349
    %v351 = vlaneseq
    %v352 = vshrl.u32 %v351, 7
    %v353 = vsub.s32 %v350, %v352
    %v354 = vrot.slane %v340, %v353
    %v355 = vcombine.high %v347, %v347
    %v356 = vcombine.high %v354, %v354
    %373 = vmatprep.subr.mxu0 0.0
    %374 = vmatpush1.msra.mxu0 %v22
    %375 = vmatprep.subr.mxu0 0.0
    %376 = vmatpush1.msra.mxu0 %v23
    %377 = vmatprep.subr.mxu0 0.0
    %378 = vmatpush1.msra.mxu0 %v24
    %379 = vmatprep.subr.mxu0 0.0
    %380 = vmatpush1.msra.mxu0 %v25
    %381 = vmatprep.subr.mxu0 0.0
    %382 = vmatpush1.msra.mxu0 %v26
    %383 = vmatprep.subr.mxu0 0.0
    %384 = vmatpush1.msra.mxu0 %v27
    %385 = vmatprep.subr.mxu0 0.0
    %386 = vmatpush1.msra.mxu0 %v28
    %387 = vmatprep.subr.mxu0 0.0
    %388 = vmatpush1.msra.mxu0 %v29
    %389 = vmatprep.subr.mxu0 0.0
    %390 = vmatpush1.msra.mxu0 %v30
    %391 = vmatprep.subr.mxu0 0.0
    %392 = vmatpush1.msra.mxu0 %v31
    %393 = vmatprep.subr.mxu0 0.0
    %394 = vmatpush1.msra.mxu0 %v32
    %395 = vmatprep.subr.mxu0 0.0
    %396 = vmatpush1.msra.mxu0 %v33
    %397 = vmatprep.subr.mxu0 0.0
    %398 = vmatpush1.msra.mxu0 %v34
    %399 = vmatprep.subr.mxu0 0.0
    %400 = vmatpush1.msra.mxu0 %v35
    %401 = vmatprep.subr.mxu0 0.0
    %402 = vmatpush1.msra.mxu0 %v36
    %403 = vmatprep.subr.mxu0 0.0
    %404 = vmatpush1.msra.mxu0 %v37
    %405 = vmatprep.subr.mxu0 0.0
    %406 = vmatpush1.msra.mxu0 %v38
    %407 = vmatprep.subr.mxu0 0.0
    %408 = vmatpush1.msra.mxu0 %v39
    %409 = vmatprep.subr.mxu0 0.0
    %410 = vmatpush1.msra.mxu0 %v40
    %411 = vmatprep.subr.mxu0 0.0
    %412 = vmatpush1.msra.mxu0 %v41
    %413 = vmatprep.subr.mxu0 0.0
    %414 = vmatpush1.msra.mxu0 %v42
    %415 = vmatprep.subr.mxu0 0.0
    %416 = vmatpush1.msra.mxu0 %v43
    %417 = vmatprep.subr.mxu0 0.0
    %418 = vmatpush1.msra.mxu0 %v44
    %419 = vmatprep.subr.mxu0 0.0
    %420 = vmatpush1.msra.mxu0 %v45
    %421 = vmatprep.subr.mxu0 0.0
    %422 = vmatpush1.msra.mxu0 %v46
    %423 = vmatprep.subr.mxu0 0.0
    %424 = vmatpush1.msra.mxu0 %v47
    %425 = vmatprep.subr.mxu0 0.0
    %426 = vmatpush1.msra.mxu0 %v48
    %427 = vmatprep.subr.mxu0 0.0
    %428 = vmatpush1.msra.mxu0 %v49
    %429 = vmatprep.subr.mxu0 0.0
    %430 = vmatpush1.msra.mxu0 %v50
    %431 = vmatprep.subr.mxu0 0.0
    %432 = vmatpush1.msra.mxu0 %v51
    %433 = vmatprep.subr.mxu0 0.0
    %434 = vmatpush1.msra.mxu0 %v52
    %435 = vmatprep.subr.mxu0 0.0
    %436 = vmatpush1.msra.mxu0 %v53
    %437 = vmatprep.mubr.f32.mxu0 %v304
    %438 = vmatmul.mubr.f32.gmra.mrb[0].mxu0 %v296
    %v439 = vpop.f32.mrb[0].mxu0
    %v440 = vadd.f32 %v283, %v439
    %v441 = vpop.f32.mrb[0].mxu0
    %442 = vdwg.mxu0
    %443 = vmatprep.subr.mxu0 0.0
    %444 = vmatpush1.msra.mxu0 %v54
    %445 = vmatprep.subr.mxu0 0.0
    %446 = vmatpush1.msra.mxu0 %v55
    %447 = vmatprep.subr.mxu0 0.0
    %448 = vmatpush1.msra.mxu0 %v56
    %449 = vmatprep.subr.mxu0 0.0
    %450 = vmatpush1.msra.mxu0 %v57
    %451 = vmatprep.subr.mxu0 0.0
    %452 = vmatpush1.msra.mxu0 %v58
    %453 = vmatprep.subr.mxu0 0.0
    %454 = vmatpush1.msra.mxu0 %v59
    %455 = vmatprep.subr.mxu0 0.0
    %456 = vmatpush1.msra.mxu0 %v60
    %457 = vmatprep.subr.mxu0 0.0
    %458 = vmatpush1.msra.mxu0 %v61
    %459 = vmatprep.subr.mxu0 0.0
    %460 = vmatpush1.msra.mxu0 %v62
    %461 = vmatprep.subr.mxu0 0.0
    %462 = vmatpush1.msra.mxu0 %v63
    %463 = vmatprep.subr.mxu0 0.0
    %464 = vmatpush1.msra.mxu0 %v64
    %465 = vmatprep.subr.mxu0 0.0
    %466 = vmatpush1.msra.mxu0 %v65
    %467 = vmatprep.subr.mxu0 0.0
    %468 = vmatpush1.msra.mxu0 %v66
    %469 = vmatprep.subr.mxu0 0.0
    %470 = vmatpush1.msra.mxu0 %v67
    %471 = vmatprep.subr.mxu0 0.0
    %472 = vmatpush1.msra.mxu0 %v68
    %473 = vmatprep.subr.mxu0 0.0
    %474 = vmatpush1.msra.mxu0 %v69
    %475 = vmatprep.subr.mxu0 0.0
    %476 = vmatpush1.msra.mxu0 %v70
    %477 = vmatprep.subr.mxu0 0.0
    %478 = vmatpush1.msra.mxu0 %v71
    %479 = vmatprep.subr.mxu0 0.0
    %480 = vmatpush1.msra.mxu0 %v72
    %481 = vmatprep.subr.mxu0 0.0
    %482 = vmatpush1.msra.mxu0 %v73
    %483 = vmatprep.subr.mxu0 0.0
    %484 = vmatpush1.msra.mxu0 %v74
    %485 = vmatprep.subr.mxu0 0.0
    %486 = vmatpush1.msra.mxu0 %v75
    %487 = vmatprep.subr.mxu0 0.0
    %488 = vmatpush1.msra.mxu0 %v76
    %489 = vmatprep.subr.mxu0 0.0
    %490 = vmatpush1.msra.mxu0 %v77
    %491 = vmatprep.subr.mxu0 0.0
    %492 = vmatpush1.msra.mxu0 %v78
    %493 = vmatprep.subr.mxu0 0.0
    %494 = vmatpush1.msra.mxu0 %v79
    %495 = vmatprep.subr.mxu0 0.0
    %496 = vmatpush1.msra.mxu0 %v80
    %497 = vmatprep.subr.mxu0 0.0
    %498 = vmatpush1.msra.mxu0 %v81
    %499 = vmatprep.subr.mxu0 0.0
    %500 = vmatpush1.msra.mxu0 %v82
    %501 = vmatprep.subr.mxu0 0.0
    %502 = vmatpush1.msra.mxu0 %v83
    %503 = vmatprep.subr.mxu0 0.0
    %504 = vmatpush1.msra.mxu0 %v84
    %505 = vmatprep.subr.mxu0 0.0
    %506 = vmatpush1.msra.mxu0 %v85
    %507 = vmatprep.mubr.f32.mxu0 %v305
    %508 = vmatmul.mubr.f32.gmra.mrb[0].mxu0 %v303
    %v509 = vpop.f32.mrb[0].mxu0
    %v510 = vadd.f32 %v440, %v509
    %v511 = vpop.f32.mrb[0].mxu0
    %512 = vdwg.mxu0
    %513 = vmatprep.subr.mxu0 0.0
    %514 = vmatpush1.msra.mxu0 %v86
    %515 = vmatprep.subr.mxu0 0.0
    %516 = vmatpush1.msra.mxu0 %v87
    %517 = vmatprep.subr.mxu0 0.0
    %518 = vmatpush1.msra.mxu0 %v88
    %519 = vmatprep.subr.mxu0 0.0
    %520 = vmatpush1.msra.mxu0 %v89
    %521 = vmatprep.subr.mxu0 0.0
    %522 = vmatpush1.msra.mxu0 %v90
    %523 = vmatprep.subr.mxu0 0.0
    %524 = vmatpush1.msra.mxu0 %v91
    %525 = vmatprep.subr.mxu0 0.0
    %526 = vmatpush1.msra.mxu0 %v92
    %527 = vmatprep.subr.mxu0 0.0
    %528 = vmatpush1.msra.mxu0 %v93
    %529 = vmatprep.subr.mxu0 0.0
    %530 = vmatpush1.msra.mxu0 %v94
    %531 = vmatprep.subr.mxu0 0.0
    %532 = vmatpush1.msra.mxu0 %v95
    %533 = vmatprep.subr.mxu0 0.0
    %534 = vmatpush1.msra.mxu0 %v96
    %535 = vmatprep.subr.mxu0 0.0
    %536 = vmatpush1.msra.mxu0 %v97
    %537 = vmatprep.subr.mxu0 0.0
    %538 = vmatpush1.msra.mxu0 %v98
    %539 = vmatprep.subr.mxu0 0.0
    %540 = vmatpush1.msra.mxu0 %v99
    %541 = vmatprep.subr.mxu0 0.0
    %542 = vmatpush1.msra.mxu0 %v100
    %543 = vmatprep.subr.mxu0 0.0
    %544 = vmatpush1.msra.mxu0 %v101
    %545 = vmatprep.subr.mxu0 0.0
    %546 = vmatpush1.msra.mxu0 %v102
    %547 = vmatprep.subr.mxu0 0.0
    %548 = vmatpush1.msra.mxu0 %v103
    %549 = vmatprep.subr.mxu0 0.0
    %550 = vmatpush1.msra.mxu0 %v104
    %551 = vmatprep.subr.mxu0 0.0
    %552 = vmatpush1.msra.mxu0 %v105
    %553 = vmatprep.subr.mxu0 0.0
    %554 = vmatpush1.msra.mxu0 %v106
    %555 = vmatprep.subr.mxu0 0.0
    %556 = vmatpush1.msra.mxu0 %v107
    %557 = vmatprep.subr.mxu0 0.0
    %558 = vmatpush1.msra.mxu0 %v108
    %559 = vmatprep.subr.mxu0 0.0
    %560 = vmatpush1.msra.mxu0 %v109
    %561 = vmatprep.subr.mxu0 0.0
    %562 = vmatpush1.msra.mxu0 %v110
    %563 = vmatprep.subr.mxu0 0.0
    %564 = vmatpush1.msra.mxu0 %v111
    %565 = vmatprep.subr.mxu0 0.0
    %566 = vmatpush1.msra.mxu0 %v112
    %567 = vmatprep.subr.mxu0 0.0
    %568 = vmatpush1.msra.mxu0 %v113
    %569 = vmatprep.subr.mxu0 0.0
    %570 = vmatpush1.msra.mxu0 %v114
    %571 = vmatprep.subr.mxu0 0.0
    %572 = vmatpush1.msra.mxu0 %v115
    %573 = vmatprep.subr.mxu0 0.0
    %574 = vmatpush1.msra.mxu0 %v116
    %575 = vmatprep.subr.mxu0 0.0
    %576 = vmatpush1.msra.mxu0 %v117
    %577 = vmatprep.mubr.f32.mxu0 %v321
    %578 = vmatmul.mubr.f32.gmra.mrb[0].mxu0 %v313
    %v579 = vpop.f32.mrb[0].mxu0
    %v580 = vadd.f32 %v510, %v579
    %v581 = vpop.f32.mrb[0].mxu0
    %582 = vdwg.mxu0
    %583 = vmatprep.subr.mxu0 0.0
    %584 = vmatpush1.msra.mxu0 %v118
    %585 = vmatprep.subr.mxu0 0.0
    %586 = vmatpush1.msra.mxu0 %v119
    %587 = vmatprep.subr.mxu0 0.0
    %588 = vmatpush1.msra.mxu0 %v120
    %589 = vmatprep.subr.mxu0 0.0
    %590 = vmatpush1.msra.mxu0 %v121
    %591 = vmatprep.subr.mxu0 0.0
    %592 = vmatpush1.msra.mxu0 %v122
    %593 = vmatprep.subr.mxu0 0.0
    %594 = vmatpush1.msra.mxu0 %v123
    %595 = vmatprep.subr.mxu0 0.0
    %596 = vmatpush1.msra.mxu0 %v124
    %597 = vmatprep.subr.mxu0 0.0
    %598 = vmatpush1.msra.mxu0 %v125
    %599 = vmatprep.subr.mxu0 0.0
    %600 = vmatpush1.msra.mxu0 %v126
    %601 = vmatprep.subr.mxu0 0.0
    %602 = vmatpush1.msra.mxu0 %v127
    %603 = vmatprep.subr.mxu0 0.0
    %604 = vmatpush1.msra.mxu0 %v128
    %605 = vmatprep.subr.mxu0 0.0
    %606 = vmatpush1.msra.mxu0 %v129
    %607 = vmatprep.subr.mxu0 0.0
    %608 = vmatpush1.msra.mxu0 %v130
    %609 = vmatprep.subr.mxu0 0.0
    %610 = vmatpush1.msra.mxu0 %v131
    %611 = vmatprep.subr.mxu0 0.0
    %612 = vmatpush1.msra.mxu0 %v132
    %613 = vmatprep.subr.mxu0 0.0
    %614 = vmatpush1.msra.mxu0 %v133
    %615 = vmatprep.subr.mxu0 0.0
    %616 = vmatpush1.msra.mxu0 %v134
    %617 = vmatprep.subr.mxu0 0.0
    %618 = vmatpush1.msra.mxu0 %v135
    %619 = vmatprep.subr.mxu0 0.0
    %620 = vmatpush1.msra.mxu0 %v136
    %621 = vmatprep.subr.mxu0 0.0
    %622 = vmatpush1.msra.mxu0 %v137
    %623 = vmatprep.subr.mxu0 0.0
    %624 = vmatpush1.msra.mxu0 %v138
    %625 = vmatprep.subr.mxu0 0.0
    %626 = vmatpush1.msra.mxu0 %v139
    %627 = vmatprep.subr.mxu0 0.0
    %628 = vmatpush1.msra.mxu0 %v140
    %629 = vmatprep.subr.mxu0 0.0
    %630 = vmatpush1.msra.mxu0 %v141
    %631 = vmatprep.subr.mxu0 0.0
    %632 = vmatpush1.msra.mxu0 %v142
    %633 = vmatprep.subr.mxu0 0.0
    %634 = vmatpush1.msra.mxu0 %v143
    %635 = vmatprep.subr.mxu0 0.0
    %636 = vmatpush1.msra.mxu0 %v144
    %637 = vmatprep.subr.mxu0 0.0
    %638 = vmatpush1.msra.mxu0 %v145
    %639 = vmatprep.subr.mxu0 0.0
    %640 = vmatpush1.msra.mxu0 %v146
    %641 = vmatprep.subr.mxu0 0.0
    %642 = vmatpush1.msra.mxu0 %v147
    %643 = vmatprep.subr.mxu0 0.0
    %644 = vmatpush1.msra.mxu0 %v148
    %645 = vmatprep.subr.mxu0 0.0
    %646 = vmatpush1.msra.mxu0 %v149
    %647 = vmatprep.mubr.f32.mxu0 %v322
    %648 = vmatmul.mubr.f32.gmra.mrb[0].mxu0 %v320
    %v649 = vpop.f32.mrb[0].mxu0
    %v650 = vadd.f32 %v580, %v649
    %v651 = vpop.f32.mrb[0].mxu0
    %652 = vdwg.mxu0
    %653 = vmatprep.subr.mxu0 0.0
    %654 = vmatpush1.msra.mxu0 %v150
    %655 = vmatprep.subr.mxu0 0.0
    %656 = vmatpush1.msra.mxu0 %v151
    %657 = vmatprep.subr.mxu0 0.0
    %658 = vmatpush1.msra.mxu0 %v152
    %659 = vmatprep.subr.mxu0 0.0
    %660 = vmatpush1.msra.mxu0 %v153
    %661 = vmatprep.subr.mxu0 0.0
    %662 = vmatpush1.msra.mxu0 %v154
    %663 = vmatprep.subr.mxu0 0.0
    %664 = vmatpush1.msra.mxu0 %v155
    %665 = vmatprep.subr.mxu0 0.0
    %666 = vmatpush1.msra.mxu0 %v156
    %667 = vmatprep.subr.mxu0 0.0
    %668 = vmatpush1.msra.mxu0 %v157
    %669 = vmatprep.subr.mxu0 0.0
    %670 = vmatpush1.msra.mxu0 %v158
    %671 = vmatprep.subr.mxu0 0.0
    %672 = vmatpush1.msra.mxu0 %v159
    %673 = vmatprep.subr.mxu0 0.0
    %674 = vmatpush1.msra.mxu0 %v160
    %675 = vmatprep.subr.mxu0 0.0
    %676 = vmatpush1.msra.mxu0 %v161
    %677 = vmatprep.subr.mxu0 0.0
    %678 = vmatpush1.msra.mxu0 %v162
    %679 = vmatprep.subr.mxu0 0.0
    %680 = vmatpush1.msra.mxu0 %v163
    %681 = vmatprep.subr.mxu0 0.0
    %682 = vmatpush1.msra.mxu0 %v164
    %683 = vmatprep.subr.mxu0 0.0
    %684 = vmatpush1.msra.mxu0 %v165
    %685 = vmatprep.subr.mxu0 0.0
    %686 = vmatpush1.msra.mxu0 %v166
    %687 = vmatprep.subr.mxu0 0.0
    %688 = vmatpush1.msra.mxu0 %v167
    %689 = vmatprep.subr.mxu0 0.0
    %690 = vmatpush1.msra.mxu0 %v168
    %691 = vmatprep.subr.mxu0 0.0
    %692 = vmatpush1.msra.mxu0 %v169
    %693 = vmatprep.subr.mxu0 0.0
    %694 = vmatpush1.msra.mxu0 %v170
    %695 = vmatprep.subr.mxu0 0.0
    %696 = vmatpush1.msra.mxu0 %v171
    %697 = vmatprep.subr.mxu0 0.0
    %698 = vmatpush1.msra.mxu0 %v172
    %699 = vmatprep.subr.mxu0 0.0
    %700 = vmatpush1.msra.mxu0 %v173
    %701 = vmatprep.subr.mxu0 0.0
    %702 = vmatpush1.msra.mxu0 %v174
    %703 = vmatprep.subr.mxu0 0.0
    %704 = vmatpush1.msra.mxu0 %v175
    %705 = vmatprep.subr.mxu0 0.0
    %706 = vmatpush1.msra.mxu0 %v176
    %707 = vmatprep.subr.mxu0 0.0
    %708 = vmatpush1.msra.mxu0 %v177
    %709 = vmatprep.subr.mxu0 0.0
    %710 = vmatpush1.msra.mxu0 %v178
    %711 = vmatprep.subr.mxu0 0.0
    %712 = vmatpush1.msra.mxu0 %v179
    %713 = vmatprep.subr.mxu0 0.0
    %714 = vmatpush1.msra.mxu0 %v180
    %715 = vmatprep.subr.mxu0 0.0
    %716 = vmatpush1.msra.mxu0 %v181
    %717 = vmatprep.mubr.f32.mxu0 %v338
    %718 = vmatmul.mubr.f32.gmra.mrb[0].mxu0 %v330
    %v719 = vpop.f32.mrb[0].mxu0
    %v720 = vadd.f32 %v650, %v719
    %v721 = vpop.f32.mrb[0].mxu0
    %722 = vdwg.mxu0
    %723 = vmatprep.subr.mxu0 0.0
    %724 = vmatpush1.msra.mxu0 %v182
    %725 = vmatprep.subr.mxu0 0.0
    %726 = vmatpush1.msra.mxu0 %v183
    %727 = vmatprep.subr.mxu0 0.0
    %728 = vmatpush1.msra.mxu0 %v184
    %729 = vmatprep.subr.mxu0 0.0
    %730 = vmatpush1.msra.mxu0 %v185
    %731 = vmatprep.subr.mxu0 0.0
    %732 = vmatpush1.msra.mxu0 %v186
    %733 = vmatprep.subr.mxu0 0.0
    %734 = vmatpush1.msra.mxu0 %v187
    %735 = vmatprep.subr.mxu0 0.0
    %736 = vmatpush1.msra.mxu0 %v188
    %737 = vmatprep.subr.mxu0 0.0
    %738 = vmatpush1.msra.mxu0 %v189
    %739 = vmatprep.subr.mxu0 0.0
    %740 = vmatpush1.msra.mxu0 %v190
    %741 = vmatprep.subr.mxu0 0.0
    %742 = vmatpush1.msra.mxu0 %v191
    %743 = vmatprep.subr.mxu0 0.0
    %744 = vmatpush1.msra.mxu0 %v192
    %745 = vmatprep.subr.mxu0 0.0
    %746 = vmatpush1.msra.mxu0 %v193
    %747 = vmatprep.subr.mxu0 0.0
    %748 = vmatpush1.msra.mxu0 %v194
    %749 = vmatprep.subr.mxu0 0.0
    %750 = vmatpush1.msra.mxu0 %v195
    %751 = vmatprep.subr.mxu0 0.0
    %752 = vmatpush1.msra.mxu0 %v196
    %753 = vmatprep.subr.mxu0 0.0
    %754 = vmatpush1.msra.mxu0 %v197
    %755 = vmatprep.subr.mxu0 0.0
    %756 = vmatpush1.msra.mxu0 %v198
    %757 = vmatprep.subr.mxu0 0.0
    %758 = vmatpush1.msra.mxu0 %v199
    %759 = vmatprep.subr.mxu0 0.0
    %760 = vmatpush1.msra.mxu0 %v200
    %761 = vmatprep.subr.mxu0 0.0
    %762 = vmatpush1.msra.mxu0 %v201
    %763 = vmatprep.subr.mxu0 0.0
    %764 = vmatpush1.msra.mxu0 %v202
    %765 = vmatprep.subr.mxu0 0.0
    %766 = vmatpush1.msra.mxu0 %v203
    %767 = vmatprep.subr.mxu0 0.0
    %768 = vmatpush1.msra.mxu0 %v204
    %769 = vmatprep.subr.mxu0 0.0
    %770 = vmatpush1.msra.mxu0 %v205
    %771 = vmatprep.subr.mxu0 0.0
    %772 = vmatpush1.msra.mxu0 %v206
    %773 = vmatprep.subr.mxu0 0.0
    %774 = vmatpush1.msra.mxu0 %v207
    %775 = vmatprep.subr.mxu0 0.0
    %776 = vmatpush1.msra.mxu0 %v208
    %777 = vmatprep.subr.mxu0 0.0
    %778 = vmatpush1.msra.mxu0 %v209
    %779 = vmatprep.subr.mxu0 0.0
    %780 = vmatpush1.msra.mxu0 %v210
    %781 = vmatprep.subr.mxu0 0.0
    %782 = vmatpush1.msra.mxu0 %v211
    %783 = vmatprep.subr.mxu0 0.0
    %784 = vmatpush1.msra.mxu0 %v212
    %785 = vmatprep.subr.mxu0 0.0
    %786 = vmatpush1.msra.mxu0 %v213
    %787 = vmatprep.mubr.f32.mxu0 %v339
    %788 = vmatmul.mubr.f32.gmra.mrb[0].mxu0 %v337
    %v789 = vpop.f32.mrb[0].mxu0
    %v790 = vadd.f32 %v720, %v789
    %v791 = vpop.f32.mrb[0].mxu0
    %792 = vdwg.mxu0
    %793 = vmatprep.subr.mxu0 0.0
    %794 = vmatpush1.msra.mxu0 %v214
    %795 = vmatprep.subr.mxu0 0.0
    %796 = vmatpush1.msra.mxu0 %v215
    %797 = vmatprep.subr.mxu0 0.0
    %798 = vmatpush1.msra.mxu0 %v216
    %799 = vmatprep.subr.mxu0 0.0
    %800 = vmatpush1.msra.mxu0 %v217
    %801 = vmatprep.subr.mxu0 0.0
    %802 = vmatpush1.msra.mxu0 %v218
    %803 = vmatprep.subr.mxu0 0.0
    %804 = vmatpush1.msra.mxu0 %v219
    %805 = vmatprep.subr.mxu0 0.0
    %806 = vmatpush1.msra.mxu0 %v220
    %807 = vmatprep.subr.mxu0 0.0
    %808 = vmatpush1.msra.mxu0 %v221
    %809 = vmatprep.subr.mxu0 0.0
    %810 = vmatpush1.msra.mxu0 %v222
    %811 = vmatprep.subr.mxu0 0.0
    %812 = vmatpush1.msra.mxu0 %v223
    %813 = vmatprep.subr.mxu0 0.0
    %814 = vmatpush1.msra.mxu0 %v224
    %815 = vmatprep.subr.mxu0 0.0
    %816 = vmatpush1.msra.mxu0 %v225
    %817 = vmatprep.subr.mxu0 0.0
    %818 = vmatpush1.msra.mxu0 %v226
    %819 = vmatprep.subr.mxu0 0.0
    %820 = vmatpush1.msra.mxu0 %v227
    %821 = vmatprep.subr.mxu0 0.0
    %822 = vmatpush1.msra.mxu0 %v228
    %823 = vmatprep.subr.mxu0 0.0
    %824 = vmatpush1.msra.mxu0 %v229
    %825 = vmatprep.subr.mxu0 0.0
    %826 = vmatpush1.msra.mxu0 %v230
    %827 = vmatprep.subr.mxu0 0.0
    %828 = vmatpush1.msra.mxu0 %v231
    %829 = vmatprep.subr.mxu0 0.0
    %830 = vmatpush1.msra.mxu0 %v232
    %831 = vmatprep.subr.mxu0 0.0
    %832 = vmatpush1.msra.mxu0 %v233
    %833 = vmatprep.subr.mxu0 0.0
    %834 = vmatpush1.msra.mxu0 %v234
    %835 = vmatprep.subr.mxu0 0.0
    %836 = vmatpush1.msra.mxu0 %v235
    %837 = vmatprep.subr.mxu0 0.0
    %838 = vmatpush1.msra.mxu0 %v236
    %839 = vmatprep.subr.mxu0 0.0
    %840 = vmatpush1.msra.mxu0 %v237
    %841 = vmatprep.subr.mxu0 0.0
    %842 = vmatpush1.msra.mxu0 %v238
    %843 = vmatprep.subr.mxu0 0.0
    %844 = vmatpush1.msra.mxu0 %v239
    %845 = vmatprep.subr.mxu0 0.0
    %846 = vmatpush1.msra.mxu0 %v240
    %847 = vmatprep.subr.mxu0 0.0
    %848 = vmatpush1.msra.mxu0 %v241
    %849 = vmatprep.subr.mxu0 0.0
    %850 = vmatpush1.msra.mxu0 %v242
    %851 = vmatprep.subr.mxu0 0.0
    %852 = vmatpush1.msra.mxu0 %v243
    %853 = vmatprep.subr.mxu0 0.0
    %854 = vmatpush1.msra.mxu0 %v244
    %855 = vmatprep.subr.mxu0 0.0
    %856 = vmatpush1.msra.mxu0 %v245
    %857 = vmatprep.mubr.f32.mxu0 %v355
    %858 = vmatmul.mubr.f32.gmra.mrb[0].mxu0 %v347
    %v859 = vpop.f32.mrb[0].mxu0
    %v860 = vadd.f32 %v790, %v859
    %v861 = vpop.f32.mrb[0].mxu0
    %862 = vdwg.mxu0
    %863 = vmatprep.subr.mxu0 0.0
    %864 = vmatpush1.msra.mxu0 %v246
    %865 = vmatprep.subr.mxu0 0.0
    %866 = vmatpush1.msra.mxu0 %v247
    %867 = vmatprep.subr.mxu0 0.0
    %868 = vmatpush1.msra.mxu0 %v248
    %869 = vmatprep.subr.mxu0 0.0
    %870 = vmatpush1.msra.mxu0 %v249
    %871 = vmatprep.subr.mxu0 0.0
    %872 = vmatpush1.msra.mxu0 %v250
    %873 = vmatprep.subr.mxu0 0.0
    %874 = vmatpush1.msra.mxu0 %v251
    %875 = vmatprep.subr.mxu0 0.0
    %876 = vmatpush1.msra.mxu0 %v252
    %877 = vmatprep.subr.mxu0 0.0
    %878 = vmatpush1.msra.mxu0 %v253
    %879 = vmatprep.subr.mxu0 0.0
    %880 = vmatpush1.msra.mxu0 %v254
    %881 = vmatprep.subr.mxu0 0.0
    %882 = vmatpush1.msra.mxu0 %v255
    %883 = vmatprep.subr.mxu0 0.0
    %884 = vmatpush1.msra.mxu0 %v256
    %885 = vmatprep.subr.mxu0 0.0
    %886 = vmatpush1.msra.mxu0 %v257
    %887 = vmatprep.subr.mxu0 0.0
    %888 = vmatpush1.msra.mxu0 %v258
    %889 = vmatprep.subr.mxu0 0.0
    %890 = vmatpush1.msra.mxu0 %v259
    %891 = vmatprep.subr.mxu0 0.0
    %892 = vmatpush1.msra.mxu0 %v260
    %893 = vmatprep.subr.mxu0 0.0
    %894 = vmatpush1.msra.mxu0 %v261
    %895 = vmatprep.subr.mxu0 0.0
    %896 = vmatpush1.msra.mxu0 %v262
    %897 = vmatprep.subr.mxu0 0.0
    %898 = vmatpush1.msra.mxu0 %v263
    %899 = vmatprep.subr.mxu0 0.0
    %900 = vmatpush1.msra.mxu0 %v264
    %901 = vmatprep.subr.mxu0 0.0
    %902 = vmatpush1.msra.mxu0 %v265
    %903 = vmatprep.subr.mxu0 0.0
    %904 = vmatpush1.msra.mxu0 %v266
    %905 = vmatprep.subr.mxu0 0.0
    %906 = vmatpush1.msra.mxu0 %v267
    %907 = vmatprep.subr.mxu0 0.0
    %908 = vmatpush1.msra.mxu0 %v268
    %909 = vmatprep.subr.mxu0 0.0
    %910 = vmatpush1.msra.mxu0 %v269
    %911 = vmatprep.subr.mxu0 0.0
    %912 = vmatpush1.msra.mxu0 %v270
    %913 = vmatprep.subr.mxu0 0.0
    %914 = vmatpush1.msra.mxu0 %v271
    %915 = vmatprep.subr.mxu0 0.0
    %916 = vmatpush1.msra.mxu0 %v272
    %917 = vmatprep.subr.mxu0 0.0
    %918 = vmatpush1.msra.mxu0 %v273
    %919 = vmatprep.subr.mxu0 0.0
    %920 = vmatpush1.msra.mxu0 %v274
    %921 = vmatprep.subr.mxu0 0.0
    %922 = vmatpush1.msra.mxu0 %v275
    %923 = vmatprep.subr.mxu0 0.0
    %924 = vmatpush1.msra.mxu0 %v276
    %925 = vmatprep.subr.mxu0 0.0
    %926 = vmatpush1.msra.mxu0 %v277
    %927 = vmatprep.mubr.f32.mxu0 %v356
    %928 = vmatmul.mubr.f32.gmra.mrb[0].mxu0 %v354
    %v929 = vpop.f32.mrb[0].mxu0
    %v930 = vadd.f32 %v860, %v929
    %v931 = vpop.f32.mrb[0].mxu0
    %932 = vdwg.mxu0
    %v933 = vld [vmem:[%s2] sm:$0xff]
    %v934 = vld [vmem:[%s3] sm:$0x1]
    %v936 = vlaneseq
    %v937 = vshrl.u32 %v936, 7
    %v938 = vsub.s32 0, %v937
    %v939 = vrot.slane %v934, %v938
    %940 = vrot.lane.b32.xlu0 %v939, 120
    %v941 = vpop.permute.xlu0 %940
    %vm943 = vcmask 64512
    %v945 = vsel %vm943, %v930, 0
    %947 = vmatprep.subr.mxu0 0.0
    %948 = vmatpush1.msra.mxu0 %v933
    %949 = vmatprep.subr.mxu0 0.0
    %950 = vmatpush1.msra.mxu0 0.0
    %951 = vmatprep.subr.mxu0 0.0
    %952 = vmatpush1.msra.mxu0 0.0
    %953 = vmatprep.subr.mxu0 0.0
    %954 = vmatpush1.msra.mxu0 0.0
    %955 = vmatprep.subr.mxu0 0.0
    %956 = vmatpush1.msra.mxu0 0.0
    %957 = vmatprep.subr.mxu0 0.0
    %958 = vmatpush1.msra.mxu0 0.0
    %959 = vmatprep.subr.mxu0 0.0
    %960 = vmatpush1.msra.mxu0 0.0
    %961 = vmatprep.subr.mxu0 0.0
    %962 = vmatpush1.msra.mxu0 0.0
    %963 = vmatprep.subr.mxu0 0.0
    %964 = vmatpush1.msra.mxu0 0.0
    %965 = vmatprep.subr.mxu0 0.0
    %966 = vmatpush1.msra.mxu0 0.0
    %967 = vmatprep.subr.mxu0 0.0
    %968 = vmatpush1.msra.mxu0 0.0
    %969 = vmatprep.subr.mxu0 0.0
    %970 = vmatpush1.msra.mxu0 0.0
    %971 = vmatprep.subr.mxu0 0.0
    %972 = vmatpush1.msra.mxu0 0.0
    %973 = vmatprep.subr.mxu0 0.0
    %974 = vmatpush1.msra.mxu0 0.0
    %975 = vmatprep.subr.mxu0 0.0
    %976 = vmatpush1.msra.mxu0 0.0
    %977 = vmatprep.subr.mxu0 0.0
    %978 = vmatpush1.msra.mxu0 0.0
    %979 = vmatprep.subr.mxu0 0.0
    %980 = vmatpush1.msra.mxu0 0.0
    %981 = vmatprep.subr.mxu0 0.0
    %982 = vmatpush1.msra.mxu0 0.0
    %983 = vmatprep.subr.mxu0 0.0
    %984 = vmatpush1.msra.mxu0 0.0
    %985 = vmatprep.subr.mxu0 0.0
    %986 = vmatpush1.msra.mxu0 0.0
    %987 = vmatprep.subr.mxu0 0.0
    %988 = vmatpush1.msra.mxu0 0.0
    %989 = vmatprep.subr.mxu0 0.0
    %990 = vmatpush1.msra.mxu0 0.0
    %991 = vmatprep.subr.mxu0 0.0
    %992 = vmatpush1.msra.mxu0 0.0
    %993 = vmatprep.subr.mxu0 0.0
    %994 = vmatpush1.msra.mxu0 0.0
    %995 = vmatprep.subr.mxu0 0.0
    %996 = vmatpush1.msra.mxu0 0.0
    %997 = vmatprep.subr.mxu0 0.0
    %998 = vmatpush1.msra.mxu0 0.0
    %999 = vmatprep.subr.mxu0 0.0
    %1000 = vmatpush1.msra.mxu0 0.0
    %1001 = vmatprep.subr.mxu0 0.0
    %1002 = vmatpush1.msra.mxu0 0.0
    %1003 = vmatprep.subr.mxu0 0.0
    %1004 = vmatpush1.msra.mxu0 0.0
    %1005 = vmatprep.subr.mxu0 0.0
    %1006 = vmatpush1.msra.mxu0 0.0
    %1007 = vmatprep.subr.mxu0 0.0
    %1008 = vmatpush1.msra.mxu0 0.0
    %1009 = vmatprep.subr.mxu0 0.0
    %1010 = vmatpush1.msra.mxu0 0.0
    %1011 = vmatprep.mubr.f32.mxu0 0.0
    %1012 = vmatmul.mubr.f32.gmra.mrb[0].mxu0 %v945
    %v1013 = vpop.f32.mrb[0].mxu0
    %v1014 = vadd.f32 %v941, %v1013
    %v1015 = vpop.f32.mrb[0].mxu0
    %1016 = vdwg.mxu0
    %v1017 = vmax.f32 %v1014, 0.0
    %1019 = vrot.lane.b32.xlu0 %v933, 120
    %v1020 = vpop.permute.xlu0 %1019
    %1022 = vrot.lane.b32.xlu0 %v939, 112
    %v1023 = vpop.permute.xlu0 %1022
    %v1026 = vsel %vm943, %v1017, 0
    %1028 = vmatprep.subr.mxu0 0.0
    %1029 = vmatpush1.msra.mxu0 %v1020
    %1030 = vmatprep.subr.mxu0 0.0
    %1031 = vmatpush1.msra.mxu0 0.0
    %1032 = vmatprep.subr.mxu0 0.0
    %1033 = vmatpush1.msra.mxu0 0.0
    %1034 = vmatprep.subr.mxu0 0.0
    %1035 = vmatpush1.msra.mxu0 0.0
    %1036 = vmatprep.subr.mxu0 0.0
    %1037 = vmatpush1.msra.mxu0 0.0
    %1038 = vmatprep.subr.mxu0 0.0
    %1039 = vmatpush1.msra.mxu0 0.0
    %1040 = vmatprep.subr.mxu0 0.0
    %1041 = vmatpush1.msra.mxu0 0.0
    %1042 = vmatprep.subr.mxu0 0.0
    %1043 = vmatpush1.msra.mxu0 0.0
    %1044 = vmatprep.subr.mxu0 0.0
    %1045 = vmatpush1.msra.mxu0 0.0
    %1046 = vmatprep.subr.mxu0 0.0
    %1047 = vmatpush1.msra.mxu0 0.0
    %1048 = vmatprep.subr.mxu0 0.0
    %1049 = vmatpush1.msra.mxu0 0.0
    %1050 = vmatprep.subr.mxu0 0.0
    %1051 = vmatpush1.msra.mxu0 0.0
    %1052 = vmatprep.subr.mxu0 0.0
    %1053 = vmatpush1.msra.mxu0 0.0
    %1054 = vmatprep.subr.mxu0 0.0
    %1055 = vmatpush1.msra.mxu0 0.0
    %1056 = vmatprep.subr.mxu0 0.0
    %1057 = vmatpush1.msra.mxu0 0.0
    %1058 = vmatprep.subr.mxu0 0.0
    %1059 = vmatpush1.msra.mxu0 0.0
    %1060 = vmatprep.subr.mxu0 0.0
    %1061 = vmatpush1.msra.mxu0 0.0
    %1062 = vmatprep.subr.mxu0 0.0
    %1063 = vmatpush1.msra.mxu0 0.0
    %1064 = vmatprep.subr.mxu0 0.0
    %1065 = vmatpush1.msra.mxu0 0.0
    %1066 = vmatprep.subr.mxu0 0.0
    %1067 = vmatpush1.msra.mxu0 0.0
    %1068 = vmatprep.subr.mxu0 0.0
    %1069 = vmatpush1.msra.mxu0 0.0
    %1070 = vmatprep.subr.mxu0 0.0
    %1071 = vmatpush1.msra.mxu0 0.0
    %1072 = vmatprep.subr.mxu0 0.0
    %1073 = vmatpush1.msra.mxu0 0.0
    %1074 = vmatprep.subr.mxu0 0.0
    %1075 = vmatpush1.msra.mxu0 0.0
    %1076 = vmatprep.subr.mxu0 0.0
    %1077 = vmatpush1.msra.mxu0 0.0
    %1078 = vmatprep.subr.mxu0 0.0
    %1079 = vmatpush1.msra.mxu0 0.0
    %1080 = vmatprep.subr.mxu0 0.0
    %1081 = vmatpush1.msra.mxu0 0.0
    %1082 = vmatprep.subr.mxu0 0.0
    %1083 = vmatpush1.msra.mxu0 0.0
    %1084 = vmatprep.subr.mxu0 0.0
    %1085 = vmatpush1.msra.mxu0 0.0
    %1086 = vmatprep.subr.mxu0 0.0
    %1087 = vmatpush1.msra.mxu0 0.0
    %1088 = vmatprep.subr.mxu0 0.0
    %1089 = vmatpush1.msra.mxu0 0.0
    %1090 = vmatprep.subr.mxu0 0.0
    %1091 = vmatpush1.msra.mxu0 0.0
    %1092 = vmatprep.mubr.f32.mxu0 0.0
    %1093 = vmatmul.mubr.f32.gmra.mrb[0].mxu0 %v1026
    %v1094 = vpop.f32.mrb[0].mxu0
    %v1095 = vadd.f32 %v1023, %v1094
    %v1096 = vpop.f32.mrb[0].mxu0
    %1097 = vdwg.mxu0
    %v1098 = vmax.f32 %v1095, 0.0
    %1099 = vrot.lane.b32.xlu0 %v933, 112
    %v1100 = vpop.permute.xlu0 %1099
    %1102 = vrot.lane.b32.xlu0 %v939, 104
    %v1103 = vpop.permute.xlu0 %1102
    %v1106 = vsel %vm943, %v1098, 0
    %1108 = vmatprep.subr.mxu0 0.0
    %1109 = vmatpush1.msra.mxu0 %v1100
    %1110 = vmatprep.subr.mxu0 0.0
    %1111 = vmatpush1.msra.mxu0 0.0
    %1112 = vmatprep.subr.mxu0 0.0
    %1113 = vmatpush1.msra.mxu0 0.0
    %1114 = vmatprep.subr.mxu0 0.0
    %1115 = vmatpush1.msra.mxu0 0.0
    %1116 = vmatprep.subr.mxu0 0.0
    %1117 = vmatpush1.msra.mxu0 0.0
    %1118 = vmatprep.subr.mxu0 0.0
    %1119 = vmatpush1.msra.mxu0 0.0
    %1120 = vmatprep.subr.mxu0 0.0
    %1121 = vmatpush1.msra.mxu0 0.0
    %1122 = vmatprep.subr.mxu0 0.0
    %1123 = vmatpush1.msra.mxu0 0.0
    %1124 = vmatprep.subr.mxu0 0.0
    %1125 = vmatpush1.msra.mxu0 0.0
    %1126 = vmatprep.subr.mxu0 0.0
    %1127 = vmatpush1.msra.mxu0 0.0
    %1128 = vmatprep.subr.mxu0 0.0
    %1129 = vmatpush1.msra.mxu0 0.0
    %1130 = vmatprep.subr.mxu0 0.0
    %1131 = vmatpush1.msra.mxu0 0.0
    %1132 = vmatprep.subr.mxu0 0.0
    %1133 = vmatpush1.msra.mxu0 0.0
    %1134 = vmatprep.subr.mxu0 0.0
    %1135 = vmatpush1.msra.mxu0 0.0
    %1136 = vmatprep.subr.mxu0 0.0
    %1137 = vmatpush1.msra.mxu0 0.0
    %1138 = vmatprep.subr.mxu0 0.0
    %1139 = vmatpush1.msra.mxu0 0.0
    %1140 = vmatprep.subr.mxu0 0.0
    %1141 = vmatpush1.msra.mxu0 0.0
    %1142 = vmatprep.subr.mxu0 0.0
    %1143 = vmatpush1.msra.mxu0 0.0
    %1144 = vmatprep.subr.mxu0 0.0
    %1145 = vmatpush1.msra.mxu0 0.0
    %1146 = vmatprep.subr.mxu0 0.0
    %1147 = vmatpush1.msra.mxu0 0.0
    %1148 = vmatprep.subr.mxu0 0.0
    %1149 = vmatpush1.msra.mxu0 0.0
    %1150 = vmatprep.subr.mxu0 0.0
    %1151 = vmatpush1.msra.mxu0 0.0
    %1152 = vmatprep.subr.mxu0 0.0
    %1153 = vmatpush1.msra.mxu0 0.0
    %1154 = vmatprep.subr.mxu0 0.0
    %1155 = vmatpush1.msra.mxu0 0.0
    %1156 = vmatprep.subr.mxu0 0.0
    %1157 = vmatpush1.msra.mxu0 0.0
    %1158 = vmatprep.subr.mxu0 0.0
    %1159 = vmatpush1.msra.mxu0 0.0
    %1160 = vmatprep.subr.mxu0 0.0
    %1161 = vmatpush1.msra.mxu0 0.0
    %1162 = vmatprep.subr.mxu0 0.0
    %1163 = vmatpush1.msra.mxu0 0.0
    %1164 = vmatprep.subr.mxu0 0.0
    %1165 = vmatpush1.msra.mxu0 0.0
    %1166 = vmatprep.subr.mxu0 0.0
    %1167 = vmatpush1.msra.mxu0 0.0
    %1168 = vmatprep.subr.mxu0 0.0
    %1169 = vmatpush1.msra.mxu0 0.0
    %1170 = vmatprep.subr.mxu0 0.0
    %1171 = vmatpush1.msra.mxu0 0.0
    %1172 = vmatprep.mubr.f32.mxu0 0.0
    %1173 = vmatmul.mubr.f32.gmra.mrb[0].mxu0 %v1106
    %v1174 = vpop.f32.mrb[0].mxu0
    %v1175 = vadd.f32 %v1103, %v1174
    %v1176 = vpop.f32.mrb[0].mxu0
    %1177 = vdwg.mxu0
    %1179 = vrot.lane.b32.xlu0 %v1175, 127
    %v1180 = vpop.permute.xlu0 %1179
    %v1182 = vmax.f32 %v1175, %v1180
    %v1183 = vsub.f32 %v1175, %v1182
    %v1184 = vmul.f32 %v1183, 1.442695
    %v1185 = vpow.pop %v1184
    %1187 = vrot.lane.b32.xlu0 %v1182, 1
    %v1188 = vpop.permute.xlu0 %1187
    %v1190 = vsub.f32 %v1175, %v1188
    %v1191 = vmul.f32 %v1190, 1.442695
    %v1192 = vpow.pop %v1191
    %1194 = vrot.lane.b32.xlu0 %v1192, 127
    %v1195 = vpop.permute.xlu0 %1194
    %v1197 = vadd.f32 %v1185, %v1195
    %v1198 = vlog2.pop %v1197
    %v1199 = vmul.f32 %v1198, 0.6931472
    %v1200 = vadd.f32 %v1182, %v1199
    %v1201 = vsub.f32 %v1175, %v1200
    %vm1202 = vcmask 1024
    %v1203 = vsel %vm1202, %v1201, 0.0
    %v1204 = vrot.slane %v1203, 4
    %v1205 = vadd.f32 %v1203, %v1204
    %v1206 = vrot.slane %v1205, 2
    %v1207 = vadd.f32 %v1205, %v1206
    %v1208 = vrot.slane %v1207, 1
    %v1209 = vadd.f32 %v1207, %v1208
    %v1210 = vrcp.pop 2.0
    %v1211 = vmul.f32 %v1209, %v1210
    %v1212 = vsub.f32 0.0, %v1211
    %v1213 = vmul.f32 %v1212, 0.5
    %vm1214 = vcmask 0
    %1215 = vst.msk [vmem:[#allocation2] sm:$0x1] %vm1214, %v1213
    // Predicated region
    $region18: #{tpu_custom_call.1} parent=1 // pred_check
      _
    $region19: #{tpu_custom_call.1} parent=1 // pred_check_branch
      %1217 = sbr.rel (0) target = $region21
    $region20: #{tpu_custom_call.1} parent=1 // pred_region
      %s1219 = ssub.s32 16, 16
      %1220 = vsyncadd [#allocation3], %s1219
      %s1222 = sshll.u32 [#allocation2], 4
      %s1223 = int_to_ptr.vmem [resolvable:$true] %s1222
      %1225 = dma.vmem_to_hbm [thread:$0]  %s1223, 16, %s4, [#allocation3]
    $region21: #{tpu_custom_call.1} parent=1 // pred_fallthru
      _
    // Predicated region
    $region22: #{tpu_custom_call.1} parent=1 // pred_check
      _
    $region23: #{tpu_custom_call.1} parent=1 // pred_check_branch
      %1227 = sbr.rel (0) target = $region25
    $region24: #{tpu_custom_call.1} parent=1 // pred_region
      %1228 = dma.done [#allocation3], 16
    $region25: #{tpu_custom_call.1} parent=1 // pred_fallthru
      _
    %1229 = vsyncpa [#allocation3], 1

</llo_original>
